<compile_context>
chip_gen: v5e
topology: v5e:2x2
jax: 0.10.0
libtpu: 0.0.40
codegen_flags: <defaults>
</compile_context>

<pallas_src>
import jax
import jax.numpy as jnp
from jax.experimental import pallas as pl
from jax.experimental.pallas import tpu as pltpu

BATCH = 64          # hard-coded in the PyTorch module's forward (x.view(batch_size, -1))
IN_DIM = 28 * 28    # 784
ENC_DIM = 20
PAD_ENC = 128       # 20 -> 128 (one full lane vreg for the hidden activation)


def autoencoder_kernel(x_ref, we_ref, be_ref, wd_ref, bd_ref, o_ref):
    """One batch tile per grid step; weights stay VMEM-resident across steps.

    x_ref : (TB, 784)      f32   batch tile of flattened input
    we_ref: (784, 128)     bf16  encoder weight, zero-padded 20 -> 128 cols
    be_ref: (1, 128)       f32   encoder bias,   zero-padded
    wd_ref: (128, 784)     bf16  decoder weight, zero-padded rows (20 -> 128)
    bd_ref: (1, 784)       f32   decoder bias
    o_ref : (TB, 784)      f32   sigmoid(decoder(relu(encoder(x))))
    """
    x = x_ref[...].astype(jnp.bfloat16)

    # encoder: (TB,784)bf16 @ (784,128)bf16 -> f32 acc, +bias, relu
    # (padded cols: weight 0 + bias 0 -> relu(0) = 0, contribute nothing downstream)
    h = jnp.dot(x, we_ref[...], preferred_element_type=jnp.float32) + be_ref[...]
    h = jnp.maximum(h, 0.0).astype(jnp.bfloat16)

    # decoder: (TB,128)bf16 @ (128,784)bf16 -> f32 acc, +bias
    y = jnp.dot(h, wd_ref[...], preferred_element_type=jnp.float32) + bd_ref[...]

    # sigmoid(y) == 0.5 * tanh(0.5 * y) + 0.5 : single EUP op, no VALU divide.
    o_ref[...] = 0.5 * jnp.tanh(0.5 * y) + 0.5


def pack_params(w_enc, b_enc, w_dec, b_dec):
    """One-time (init-time) packing: zero-pad to lane-dense shapes, weights -> bf16.

    Do NOT call this per forward pass (that was the un-hidden wrapper HBM traffic
    the perf review flagged).
    """
    we_p = (jnp.zeros((IN_DIM, PAD_ENC), jnp.bfloat16)
            .at[:, :ENC_DIM].set(w_enc.astype(jnp.bfloat16)))
    be_p = jnp.zeros((1, PAD_ENC), jnp.float32).at[:, :ENC_DIM].set(b_enc)
    wd_p = (jnp.zeros((PAD_ENC, IN_DIM), jnp.bfloat16)
            .at[:ENC_DIM, :].set(w_dec.astype(jnp.bfloat16)))
    bd_p = b_dec.astype(jnp.float32)
    return we_p, be_p, wd_p, bd_p


def _pick_tb(b):
    # Largest tile (<=256 MXU rows) that still leaves >=2 grid steps, so both
    # v7x TensorCores get batch tiles; falls back to the whole batch otherwise
    # (single step = minimal per-step overhead on single-TC v5e/v6e).
    for tb in (256, 128, 64, 32, 16, 8):
        if b % tb == 0 and b // tb >= 2:
            return tb
    return b


@jax.jit
def autoencoder_forward(x_nchw, we_p, be_p, wd_p, bd_p):
    """x_nchw: (B, 1, 28, 28) float32 -> (B, 1, 28, 28) float32. Params pre-packed."""
    b = x_nchw.shape[0]
    x2d = x_nchw.reshape(b, IN_DIM)  # == torch x.view(batch_size, -1)

    tb = _pick_tb(b)
    grid = (b // tb,)

    cost = pl.CostEstimate(
        flops=2 * b * (IN_DIM * PAD_ENC + PAD_ENC * IN_DIM),
        transcendentals=b * IN_DIM,
        bytes_accessed=(x2d.size * 4 + we_p.size * 2 + be_p.size * 4
                        + wd_p.size * 2 + bd_p.size * 4 + b * IN_DIM * 4),
    )

    out2d = pl.pallas_call(
        autoencoder_kernel,
        out_shape=jax.ShapeDtypeStruct((b, IN_DIM), jnp.float32),
        grid_spec=pltpu.PrefetchScalarGridSpec(
            num_scalar_prefetch=0,
            grid=grid,
            in_specs=[
                pl.BlockSpec((tb, IN_DIM), lambda i: (i, 0)),        # x: tiled over batch
                pl.BlockSpec((IN_DIM, PAD_ENC), lambda i: (0, 0)),   # w_enc: resident
                pl.BlockSpec((1, PAD_ENC), lambda i: (0, 0)),        # b_enc: resident
                pl.BlockSpec((PAD_ENC, IN_DIM), lambda i: (0, 0)),   # w_dec: resident
                pl.BlockSpec((1, IN_DIM), lambda i: (0, 0)),         # b_dec: resident
            ],
            out_specs=pl.BlockSpec((tb, IN_DIM), lambda i: (i, 0)),  # full 784-wide block
        ),
        compiler_params=pltpu.CompilerParams(
            dimension_semantics=("parallel",),   # shard batch tiles across TCs (v7x)
        ),
        cost_estimate=cost,
    )(x2d, we_p, be_p, wd_p, bd_p)

    return out2d.reshape(b, 1, 28, 28)


def init_params(key):
    """Deterministic param init mimicking torch.nn.Linear's U(-1/sqrt(in), 1/sqrt(in))."""
    k1, k2, k3, k4 = jax.random.split(key, 4)
    lim_e = 1.0 / jnp.sqrt(jnp.float32(IN_DIM))
    lim_d = 1.0 / jnp.sqrt(jnp.float32(ENC_DIM))
    w_enc = jax.random.uniform(k1, (IN_DIM, ENC_DIM), jnp.float32, -lim_e, lim_e)
    b_enc = jax.random.uniform(k2, (1, ENC_DIM), jnp.float32, -lim_e, lim_e)
    w_dec = jax.random.uniform(k3, (ENC_DIM, IN_DIM), jnp.float32, -lim_d, lim_d)
    b_dec = jax.random.uniform(k4, (1, IN_DIM), jnp.float32, -lim_d, lim_d)
    return w_enc, b_enc, w_dec, b_dec


if __name__ == "__main__":
    key = jax.random.PRNGKey(0)
    k_x, k_p = jax.random.split(key)

    x = jax.random.uniform(k_x, (BATCH, 1, 28, 28), jnp.float32)
    w_enc, b_enc, w_dec, b_dec = init_params(k_p)

    # One-time packing (padding + bf16 cast) outside the hot path.
    we_p, be_p, wd_p, bd_p = pack_params(w_enc, b_enc, w_dec, b_dec)

    out = autoencoder_forward(x, we_p, be_p, wd_p, bd_p)
    out = jax.block_until_ready(out)

    # Pure-JAX f32 reference. bf16 weights + EUP-tanh sigmoid => tolerance is
    # relaxed to ~1e-2 (f32 accumulation via preferred_element_type bounds the error).
    x2d = x.reshape(BATCH, -1)
    h_ref = jnp.maximum(x2d @ w_enc + b_enc, 0.0)
    ref = jax.nn.sigmoid(h_ref @ w_dec + b_dec).reshape(BATCH, 1, 28, 28)

    assert out.shape == (BATCH, 1, 28, 28)
    assert jnp.allclose(out, ref, atol=1e-2, rtol=1e-2), (
        f"max abs err = {float(jnp.max(jnp.abs(out - ref)))}")

    print("KERNEL_OK")
</pallas_src>

<mosaic_0001>
module attributes {stable_mosaic.version = 11 : i64} {
  func.func @autoencoder_kernel(%arg0: i32, %arg1: memref<32x784xf32, #tpu.memory_space<vmem>>, %arg2: memref<784x128xbf16, #tpu.memory_space<vmem>>, %arg3: memref<1x128xf32, #tpu.memory_space<vmem>>, %arg4: memref<128x784xbf16, #tpu.memory_space<vmem>>, %arg5: memref<1x784xf32, #tpu.memory_space<vmem>>, %arg6: memref<32x784xf32, #tpu.memory_space<vmem>>) attributes {dimension_semantics = [#tpu.dimension_semantics<parallel>], iteration_bounds = array<i64: 2>, scalar_prefetch = 0 : i64, scratch_operands = 0 : i64, tpu.core_type = #tpu.core_type<tc>, window_params = [{transform_indices = @transform_0, window_bounds = array<i64: 32, 784>}, {pipeline_mode = #tpu.pipeline_mode<synchronous>, transform_indices = @transform_1, window_bounds = array<i64: 784, 128>}, {pipeline_mode = #tpu.pipeline_mode<synchronous>, transform_indices = @transform_2, window_bounds = array<i64: 1, 128>}, {pipeline_mode = #tpu.pipeline_mode<synchronous>, transform_indices = @transform_3, window_bounds = array<i64: 128, 784>}, {pipeline_mode = #tpu.pipeline_mode<synchronous>, transform_indices = @transform_4, window_bounds = array<i64: 1, 784>}, {transform_indices = @transform_5, window_bounds = array<i64: 32, 784>}]} {
    %c0 = arith.constant 0 : index
    %c0_0 = arith.constant 0 : index
    %0 = vector.load %arg1[%c0, %c0_0] : memref<32x784xf32, #tpu.memory_space<vmem>>, vector<32x784xf32>
    %1 = arith.truncf %0 : vector<32x784xf32> to vector<32x784xbf16>
    %c0_1 = arith.constant 0 : index
    %c0_2 = arith.constant 0 : index
    %2 = vector.load %arg2[%c0_1, %c0_2] : memref<784x128xbf16, #tpu.memory_space<vmem>>, vector<784x128xbf16>
    %cst = arith.constant dense<0.000000e+00> : vector<32x128xf32>
    %3 = tpu.matmul %1, %2, %cst {dimension_numbers = #tpu.dot_dimension_numbers<[1], [0], [0], [1], [0, 0, 1, 1], [], []>} : vector<32x784xbf16>, vector<784x128xbf16>, vector<32x128xf32> -> vector<32x128xf32>
    %c0_3 = arith.constant 0 : index
    %c0_4 = arith.constant 0 : index
    %4 = vector.load %arg3[%c0_3, %c0_4] : memref<1x128xf32, #tpu.memory_space<vmem>>, vector<1x128xf32>
    %5 = vector.broadcast %4 : vector<1x128xf32> to vector<32x128xf32>
    %6 = arith.addf %3, %5 : vector<32x128xf32>
    %cst_5 = arith.constant 0.000000e+00 : f32
    %7 = vector.broadcast %cst_5 : f32 to vector<32x128xf32>
    %8 = arith.maximumf %6, %7 : vector<32x128xf32>
    %9 = arith.truncf %8 : vector<32x128xf32> to vector<32x128xbf16>
    %c0_6 = arith.constant 0 : index
    %c0_7 = arith.constant 0 : index
    %10 = vector.load %arg4[%c0_6, %c0_7] : memref<128x784xbf16, #tpu.memory_space<vmem>>, vector<128x784xbf16>
    %cst_8 = arith.constant dense<0.000000e+00> : vector<32x784xf32>
    %11 = tpu.matmul %9, %10, %cst_8 {dimension_numbers = #tpu.dot_dimension_numbers<[1], [0], [0], [1], [0, 0, 1, 1], [], []>} : vector<32x128xbf16>, vector<128x784xbf16>, vector<32x784xf32> -> vector<32x784xf32>
    %c0_9 = arith.constant 0 : index
    %c0_10 = arith.constant 0 : index
    %12 = vector.load %arg5[%c0_9, %c0_10] : memref<1x784xf32, #tpu.memory_space<vmem>>, vector<1x784xf32>
    %13 = vector.broadcast %12 : vector<1x784xf32> to vector<32x784xf32>
    %14 = arith.addf %11, %13 : vector<32x784xf32>
    %cst_11 = arith.constant 5.000000e-01 : f32
    %15 = vector.broadcast %cst_11 : f32 to vector<32x784xf32>
    %16 = arith.mulf %15, %14 : vector<32x784xf32>
    %17 = math.tanh %16 : vector<32x784xf32>
    %cst_12 = arith.constant 5.000000e-01 : f32
    %18 = vector.broadcast %cst_12 : f32 to vector<32x784xf32>
    %19 = arith.mulf %18, %17 : vector<32x784xf32>
    %cst_13 = arith.constant 5.000000e-01 : f32
    %20 = vector.broadcast %cst_13 : f32 to vector<32x784xf32>
    %21 = arith.addf %19, %20 : vector<32x784xf32>
    %c0_14 = arith.constant 0 : index
    %c0_15 = arith.constant 0 : index
    %22 = vector.load %arg6[%c0_14, %c0_15] : memref<32x784xf32, #tpu.memory_space<vmem>>, vector<32x784xf32>
    tpu.vector_store %arg6[%c0_14, %c0_15], %21 {strides = array<i32>} : memref<32x784xf32, #tpu.memory_space<vmem>>, vector<32x784xf32>,
    return
  }
  func.func @transform_0(%arg0: i32) -> (i32, i32) {
    %c0_i32 = arith.constant 0 : i32
    %c0_i32_0 = arith.constant 0 : i32
    return %arg0, %c0_i32 : i32, i32
  }
  func.func @transform_1(%arg0: i32) -> (i32, i32) {
    %c0_i32 = arith.constant 0 : i32
    %c0_i32_0 = arith.constant 0 : i32
    %c0_i32_1 = arith.constant 0 : i32
    return %c0_i32, %c0_i32_0 : i32, i32
  }
  func.func @transform_2(%arg0: i32) -> (i32, i32) {
    %c0_i32 = arith.constant 0 : i32
    %c0_i32_0 = arith.constant 0 : i32
    %c0_i32_1 = arith.constant 0 : i32
    return %c0_i32, %c0_i32_0 : i32, i32
  }
  func.func @transform_3(%arg0: i32) -> (i32, i32) {
    %c0_i32 = arith.constant 0 : i32
    %c0_i32_0 = arith.constant 0 : i32
    %c0_i32_1 = arith.constant 0 : i32
    return %c0_i32, %c0_i32_0 : i32, i32
  }
  func.func @transform_4(%arg0: i32) -> (i32, i32) {
    %c0_i32 = arith.constant 0 : i32
    %c0_i32_0 = arith.constant 0 : i32
    %c0_i32_1 = arith.constant 0 : i32
    return %c0_i32, %c0_i32_0 : i32, i32
  }
  func.func @transform_5(%arg0: i32) -> (i32, i32) {
    %c0_i32 = arith.constant 0 : i32
    %c0_i32_0 = arith.constant 0 : i32
    return %arg0, %c0_i32 : i32, i32
  }
}

</mosaic_0001>

<llo_original>
// kernel: autoencoder_forward.1
$region0: #{autoencoder_forward.1}
  #allocation0 [shape = 'u32[]', space=smem, size = 0x4, offset = 0x4, fixed_abs, tag = 'smem constant byte address 0x4 - core index']
  #allocation1 [shape = 'u32[72,128]{1,0:T(1,128)}', space=vmem, size = 0x9000, scoped, tag = 'internal scratch']
  %s0 = inlined_call_operand.vmem [shape: f32[64,784], index: 0, kind: input, shape index: {}]
  %s1 = inlined_call_operand.vmem [shape: bf16[784,128], index: 1, kind: input, shape index: {}]
  %s2 = inlined_call_operand.vmem [shape: f32[1,128], index: 2, kind: input, shape index: {}]
  %s3 = inlined_call_operand.vmem [shape: bf16[128,784], index: 3, kind: input, shape index: {}]
  %s4 = inlined_call_operand.vmem [shape: f32[1,784], index: 4, kind: input, shape index: {}]
  %s5 = inlined_call_operand.vmem [shape: f32[64,784], index: 5, kind: output, shape index: {}]
  %s6 = sld [smem:[#allocation0]]
  $region53: #{autoencoder_forward.1} parent=0
    _
  %s8 = ssub.s32 1, %s6
  %s9 = scalar_select 0, %s8, %s6
  loop: start=0, step=1, limit=4
  $region2: #{autoencoder_forward.1} parent=0 // loop_pre_header
    _
  $region3: #{autoencoder_forward.1} parent=0 // loop_header
    %s11 = sphi 0, %s15
    %p12 = scmp.ge.s32.totalorder %s11, 4
    %s21 = sphi 0, %s23
    %s24 = sphi 0, %s21
    %s25 = sphi 0, %s24
    %s41 = sphi 0, %s25
    %s45 = sphi 0, %s45
    %s47 = sphi 0, %s45
    %s48 = sphi 0, %s47
    %s62 = sphi 0, %s48
    %s66 = sphi 0, %s66
    %s68 = sphi 0, %s66
    %s69 = sphi 0, %s68
    %s83 = sphi 0, %s69
    %s87 = sphi 0, %s87
    %s89 = sphi 0, %s87
    %s90 = sphi 0, %s89
    %s104 = sphi 0, %s90
    %s108 = sphi 0, %s108
    %s110 = sphi 0, %s108
    %s111 = sphi 0, %s110
    %s125 = sphi 0, %s111
    %s131 = sphi 0, %s133
    %s134 = sphi 0, %s131
    %s135 = sphi 0, %s134
    %s151 = sphi 0, %s135
  $region4: #{autoencoder_forward.1} parent=0 // loop_header_branch
    %14 = sbr.rel (%p12) target = $region8
  $region5: #{autoencoder_forward.1} parent=0 // loop_body
    %s16 = ssub.s32 %s11, 1
    %s17 = ssub.s32 %s11, 2
    %s18 = sadd.s32 %s11, 1
    %s19 = ssub.s32 %s11, %s18
    %p20 = scmp.eq.s32.totalorder %s19, 0
    %s22 = sadd.s32 %s21, 1
    %s23 = scalar_select %p20, %s21, %s22
    %p26 = pneg %p20
    %p27 = scmp.eq.s32.totalorder %s11, 1
    %p28 = por %p26, %p27
    %p29 = scmp.ne.s32.totalorder %s21, %s24
    %p30 = scmp.eq.s32.totalorder %s11, 0
    %p31 = por %p29, %p30
    %p32 = scmp.ne.s32.totalorder %s21, %s24
    %p33 = scmp.eq.s32.totalorder %s16, 1
    %p34 = por %p32, %p33
    %p35 = scmp.ne.s32.totalorder %s24, %s25
    %p36 = scmp.eq.s32.totalorder %s16, 0
    %p37 = por %p35, %p36
    %p38 = scmp.ne.s32.totalorder %s24, %s25
    %p39 = scmp.eq.s32.totalorder %s17, 1
    %p40 = por %p38, %p39
    %p42 = scmp.ne.s32.totalorder %s25, %s41
    %p43 = scmp.eq.s32.totalorder %s17, 0
    %p44 = por %p42, %p43
    %s46 = sadd.s32 %s45, 1
    %p49 = scmp.eq.s32.totalorder %s11, 1
    %p50 = scmp.ne.s32.totalorder %s45, %s47
    %p51 = scmp.eq.s32.totalorder %s11, 0
    %p52 = por %p50, %p51
    %p53 = scmp.ne.s32.totalorder %s45, %s47
    %p54 = scmp.eq.s32.totalorder %s16, 1
    %p55 = por %p53, %p54
    %p56 = scmp.ne.s32.totalorder %s47, %s48
    %p57 = scmp.eq.s32.totalorder %s16, 0
    %p58 = por %p56, %p57
    %p59 = scmp.ne.s32.totalorder %s47, %s48
    %p60 = scmp.eq.s32.totalorder %s17, 1
    %p61 = por %p59, %p60
    %p63 = scmp.ne.s32.totalorder %s48, %s62
    %p64 = scmp.eq.s32.totalorder %s17, 0
    %p65 = por %p63, %p64
    %s67 = sadd.s32 %s66, 1
    %p70 = scmp.eq.s32.totalorder %s11, 1
    %p71 = scmp.ne.s32.totalorder %s66, %s68
    %p72 = scmp.eq.s32.totalorder %s11, 0
    %p73 = por %p71, %p72
    %p74 = scmp.ne.s32.totalorder %s66, %s68
    %p75 = scmp.eq.s32.totalorder %s16, 1
    %p76 = por %p74, %p75
    %p77 = scmp.ne.s32.totalorder %s68, %s69
    %p78 = scmp.eq.s32.totalorder %s16, 0
    %p79 = por %p77, %p78
    %p80 = scmp.ne.s32.totalorder %s68, %s69
    %p81 = scmp.eq.s32.totalorder %s17, 1
    %p82 = por %p80, %p81
    %p84 = scmp.ne.s32.totalorder %s69, %s83
    %p85 = scmp.eq.s32.totalorder %s17, 0
    %p86 = por %p84, %p85
    %s88 = sadd.s32 %s87, 1
    %p91 = scmp.eq.s32.totalorder %s11, 1
    %p92 = scmp.ne.s32.totalorder %s87, %s89
    %p93 = scmp.eq.s32.totalorder %s11, 0
    %p94 = por %p92, %p93
    %p95 = scmp.ne.s32.totalorder %s87, %s89
    %p96 = scmp.eq.s32.totalorder %s16, 1
    %p97 = por %p95, %p96
    %p98 = scmp.ne.s32.totalorder %s89, %s90
    %p99 = scmp.eq.s32.totalorder %s16, 0
    %p100 = por %p98, %p99
    %p101 = scmp.ne.s32.totalorder %s89, %s90
    %p102 = scmp.eq.s32.totalorder %s17, 1
    %p103 = por %p101, %p102
    %p105 = scmp.ne.s32.totalorder %s90, %s104
    %p106 = scmp.eq.s32.totalorder %s17, 0
    %p107 = por %p105, %p106
    %s109 = sadd.s32 %s108, 1
    %p112 = scmp.eq.s32.totalorder %s11, 1
    %p113 = scmp.ne.s32.totalorder %s108, %s110
    %p114 = scmp.eq.s32.totalorder %s11, 0
    %p115 = por %p113, %p114
    %p116 = scmp.ne.s32.totalorder %s108, %s110
    %p117 = scmp.eq.s32.totalorder %s16, 1
    %p118 = por %p116, %p117
    %p119 = scmp.ne.s32.totalorder %s110, %s111
    %p120 = scmp.eq.s32.totalorder %s16, 0
    %p121 = por %p119, %p120
    %p122 = scmp.ne.s32.totalorder %s110, %s111
    %p123 = scmp.eq.s32.totalorder %s17, 1
    %p124 = por %p122, %p123
    %p126 = scmp.ne.s32.totalorder %s111, %s125
    %p127 = scmp.eq.s32.totalorder %s17, 0
    %p128 = por %p126, %p127
    %s129 = ssub.s32 %s11, %s18
    %p130 = scmp.eq.s32.totalorder %s129, 0
    %s132 = sadd.s32 %s131, 1
    %s133 = scalar_select %p130, %s131, %s132
    %p136 = pneg %p130
    %p137 = scmp.eq.s32.totalorder %s11, 1
    %p138 = por %p136, %p137
    %p139 = scmp.ne.s32.totalorder %s131, %s134
    %p140 = scmp.eq.s32.totalorder %s11, 0
    %p141 = por %p139, %p140
    %p142 = scmp.ne.s32.totalorder %s131, %s134
    %p143 = scmp.eq.s32.totalorder %s16, 1
    %p144 = por %p142, %p143
    %p145 = scmp.ne.s32.totalorder %s134, %s135
    %p146 = scmp.eq.s32.totalorder %s16, 0
    %p147 = por %p145, %p146
    %p148 = scmp.ne.s32.totalorder %s134, %s135
    %p149 = scmp.eq.s32.totalorder %s17, 1
    %p150 = por %p148, %p149
    %p152 = scmp.ne.s32.totalorder %s135, %s151
    %p153 = scmp.eq.s32.totalorder %s17, 0
    %p154 = por %p152, %p153
    %p155 = scmp.le.s32.totalorder 1, %s11
    %p156 = scmp.lt.s32.totalorder %s11, 3
    %p157 = pnand %p155, %p156
    %p158 = pneg %p157
    // Predicated region
    $region9: #{autoencoder_forward.1} parent=5 // pred_check
      _
    $region10: #{autoencoder_forward.1} parent=5 // pred_check_branch
      %160 = sbr.rel (%p157) target = $region12
    $region11: #{autoencoder_forward.1} parent=5 // pred_region
      %s161 = ssub.s32 %s11, 1
      // Predicated region
      $region13: #{autoencoder_forward.1} parent=11 // pred_check
        %p162 = pneg %p58
      $region14: #{autoencoder_forward.1} parent=11 // pred_check_branch
        %164 = sbr.rel (%p162) target = $region16
      $region15: #{autoencoder_forward.1} parent=11 // pred_region
        _
      $region16: #{autoencoder_forward.1} parent=11 // pred_fallthru
        _
      // Predicated region
      $region17: #{autoencoder_forward.1} parent=11 // pred_check
        %p165 = pneg %p79
      $region18: #{autoencoder_forward.1} parent=11 // pred_check_branch
        %167 = sbr.rel (%p165) target = $region20
      $region19: #{autoencoder_forward.1} parent=11 // pred_region
        _
      $region20: #{autoencoder_forward.1} parent=11 // pred_fallthru
        _
      // Predicated region
      $region21: #{autoencoder_forward.1} parent=11 // pred_check
        %p168 = pneg %p100
      $region22: #{autoencoder_forward.1} parent=11 // pred_check_branch
        %170 = sbr.rel (%p168) target = $region24
      $region23: #{autoencoder_forward.1} parent=11 // pred_region
        _
      $region24: #{autoencoder_forward.1} parent=11 // pred_fallthru
        _
      // Predicated region
      $region25: #{autoencoder_forward.1} parent=11 // pred_check
        %p171 = pneg %p121
      $region26: #{autoencoder_forward.1} parent=11 // pred_check_branch
        %173 = sbr.rel (%p171) target = $region28
      $region27: #{autoencoder_forward.1} parent=11 // pred_region
        _
      $region28: #{autoencoder_forward.1} parent=11 // pred_fallthru
        _
    $region12: #{autoencoder_forward.1} parent=5 // pred_fallthru
      _
    %p174 = scmp.lt.s32.totalorder %s11, 2
    // Predicated region
    $region29: #{autoencoder_forward.1} parent=5 // pred_check
      %p175 = pneg %p174
    $region30: #{autoencoder_forward.1} parent=5 // pred_check_branch
      %177 = sbr.rel (%p175) target = $region32
    $region31: #{autoencoder_forward.1} parent=5 // pred_region
      // Predicated region
      $region33: #{autoencoder_forward.1} parent=31 // pred_check
        %p178 = pneg %p31
      $region34: #{autoencoder_forward.1} parent=31 // pred_check_branch
        %180 = sbr.rel (%p178) target = $region36
      $region35: #{autoencoder_forward.1} parent=31 // pred_region
        %s181 = smul.u32 4, %s11
        %p182 = scmp.lt.s32.totalorder %s181, 7
        %s183 = scalar_select %p182, %s181, 7
        %s184 = smul.addr %s183, 7
        %s185 = smul.addr %s184, 8
        %s186 = scalar_lea.vmem %s0, %s185
        %s187 = smul.u32 4, %s11
      $region36: #{autoencoder_forward.1} parent=31 // pred_fallthru
        _
    $region32: #{autoencoder_forward.1} parent=5 // pred_fallthru
      _
    %p188 = scmp.le.s32.totalorder 1, %s11
    %p189 = scmp.lt.s32.totalorder %s11, 3
    %p190 = pnand %p188, %p189
    %p191 = pneg %p190
    // Predicated region
    $region37: #{autoencoder_forward.1} parent=5 // pred_check
      _
    $region38: #{autoencoder_forward.1} parent=5 // pred_check_branch
      %193 = sbr.rel (%p190) target = $region40
    $region39: #{autoencoder_forward.1} parent=5 // pred_region
      %s194 = ssub.s32 %s11, 1
      %s195 = smul.u32 4, %s16
      %p196 = scmp.lt.s32.totalorder %s195, 7
      %s197 = scalar_select %p196, %s195, 7
      %s198 = smul.addr %s197, 7
      %s199 = smul.addr %s198, 8
      %s200 = scalar_lea.vmem %s0, %s199
      %p201 = pneg %p37
      %p202 = pneg %p34
      %p203 = pneg %p58
      %p204 = pneg %p55
      %p205 = pneg %p79
      %p206 = pneg %p76
      %p207 = pneg %p100
      %p208 = pneg %p97
      %p209 = pneg %p121
      %p210 = pneg %p118
      %p211 = pneg %p147
      %p212 = pneg %p144
      %s213 = smul.u32 4, %s16
      %p214 = scmp.lt.s32.totalorder %s213, 7
      %s215 = scalar_select %p214, %s213, 7
      %s216 = smul.addr %s215, 7
      %s217 = smul.addr %s216, 8
      %s218 = scalar_lea.vmem %s5, %s217
      %s219 = smul.u32 4, %s16
      %p220 = scmp.lt.s32.totalorder %s219, 7
      %s221 = scalar_select %p220, %s219, 7
      %s222 = smul.addr %s221, 7
      %s223 = smul.addr %s222, 8
      %s224 = scalar_lea.vmem %s0, %s223
      %s225 = smul.u32 4, %s16
      %s226 = smul.u32 4, %s16
      %p227 = scmp.lt.s32.totalorder %s226, 7
      %s228 = scalar_select %p227, %s226, 7
      %s229 = smul.addr %s228, 7
      %s230 = smul.addr %s229, 8
      %s231 = scalar_lea.vmem %s5, %s230
      %s232 = smul.u32 4, %s16
      %v234 = vld [vmem:[%s224] sm:$0xff]
      %v235 = vld [vmem:[%s224 + $0x8] sm:$0xff]
      %v236 = vld [vmem:[%s224 + $0x10] sm:$0xff]
      %v237 = vld [vmem:[%s224 + $0x18] sm:$0xff]
      %v238 = vld [vmem:[%s224 + $0x20] sm:$0xff]
      %v239 = vld [vmem:[%s224 + $0x28] sm:$0xff]
      %v240 = vld [vmem:[%s224 + $0x30] sm:$0xff]
      %v241 = vld [vmem:[%s224 + $0x38] sm:$0xff]
      %v242 = vld [vmem:[%s224 + $0x40] sm:$0xff]
      %v243 = vld [vmem:[%s224 + $0x48] sm:$0xff]
      %v244 = vld [vmem:[%s224 + $0x50] sm:$0xff]
      %v245 = vld [vmem:[%s224 + $0x58] sm:$0xff]
      %v246 = vld [vmem:[%s224 + $0x60] sm:$0xff]
      %v247 = vld [vmem:[%s224 + $0x68] sm:$0xff]
      %v248 = vld [vmem:[%s224 + $0x70] sm:$0xff]
      %v249 = vld [vmem:[%s224 + $0x78] sm:$0xff]
      %v250 = vld [vmem:[%s224 + $0x80] sm:$0xff]
      %v251 = vld [vmem:[%s224 + $0x88] sm:$0xff]
      %v252 = vld [vmem:[%s224 + $0x90] sm:$0xff]
      %v253 = vld [vmem:[%s224 + $0x98] sm:$0xff]
      %v254 = vld [vmem:[%s224 + $0xa0] sm:$0xff]
      %v255 = vld [vmem:[%s224 + $0xa8] sm:$0xff]
      %v256 = vld [vmem:[%s224 + $0xb0] sm:$0xff]
      %v257 = vld [vmem:[%s224 + $0xb8] sm:$0xff]
      %v258 = vld [vmem:[%s224 + $0xc0] sm:$0xff]
      %v259 = vld [vmem:[%s224 + $0xc8] sm:$0xff]
      %v260 = vld [vmem:[%s224 + $0xd0] sm:$0xff]
      %v261 = vld [vmem:[%s224 + $0xd8] sm:$0xff]
      %v262 = vpack.c.bf16 %v241, %v234
      %v263 = vpack.c.bf16 %v242, %v235
      %v264 = vpack.c.bf16 %v243, %v236
      %v265 = vpack.c.bf16 %v244, %v237
      %v266 = vpack.c.bf16 %v245, %v238
      %v267 = vpack.c.bf16 %v246, %v239
      %v268 = vpack.c.bf16 %v247, %v240
      %v269 = vpack.c.bf16 %v255, %v248
      %v270 = vpack.c.bf16 %v256, %v249
      %v271 = vpack.c.bf16 %v257, %v250
      %v272 = vpack.c.bf16 %v258, %v251
      %v273 = vpack.c.bf16 %v259, %v252
      %v274 = vpack.c.bf16 %v260, %v253
      %v275 = vpack.c.bf16 %v261, %v254
      %v276 = vld [vmem:[%s1] sm:$0xf]
      %v277 = vld [vmem:[%s1 + $0x4] sm:$0xf]
      %v278 = vld [vmem:[%s1 + $0x8] sm:$0xf]
      %v279 = vld [vmem:[%s1 + $0xc] sm:$0xf]
      %v280 = vld [vmem:[%s1 + $0x10] sm:$0xf]
      %v281 = vld [vmem:[%s1 + $0x14] sm:$0xf]
      %v282 = vld [vmem:[%s1 + $0x18] sm:$0xf]
      %v283 = vld [vmem:[%s1 + $0x1c] sm:$0xf]
      %v284 = vld [vmem:[%s1 + $0x20] sm:$0xf]
      %v285 = vld [vmem:[%s1 + $0x24] sm:$0xf]
      %v286 = vld [vmem:[%s1 + $0x28] sm:$0xf]
      %v287 = vld [vmem:[%s1 + $0x2c] sm:$0xf]
      %v288 = vld [vmem:[%s1 + $0x30] sm:$0xf]
      %v289 = vld [vmem:[%s1 + $0x34] sm:$0xf]
      %v290 = vld [vmem:[%s1 + $0x38] sm:$0xf]
      %v291 = vld [vmem:[%s1 + $0x3c] sm:$0xf]
      %v292 = vld [vmem:[%s1 + $0x40] sm:$0xf]
      %v293 = vld [vmem:[%s1 + $0x44] sm:$0xf]
      %v294 = vld [vmem:[%s1 + $0x48] sm:$0xf]
      %v295 = vld [vmem:[%s1 + $0x4c] sm:$0xf]
      %v296 = vld [vmem:[%s1 + $0x50] sm:$0xf]
      %v297 = vld [vmem:[%s1 + $0x54] sm:$0xf]
      %v298 = vld [vmem:[%s1 + $0x58] sm:$0xf]
      %v299 = vld [vmem:[%s1 + $0x5c] sm:$0xf]
      %v300 = vld [vmem:[%s1 + $0x60] sm:$0xf]
      %v301 = vld [vmem:[%s1 + $0x64] sm:$0xf]
      %v302 = vld [vmem:[%s1 + $0x68] sm:$0xf]
      %v303 = vld [vmem:[%s1 + $0x6c] sm:$0xf]
      %v304 = vld [vmem:[%s1 + $0x70] sm:$0xf]
      %v305 = vld [vmem:[%s1 + $0x74] sm:$0xf]
      %v306 = vld [vmem:[%s1 + $0x78] sm:$0xf]
      %v307 = vld [vmem:[%s1 + $0x7c] sm:$0xf]
      %v308 = vld [vmem:[%s1 + $0x80] sm:$0xf]
      %v309 = vld [vmem:[%s1 + $0x84] sm:$0xf]
      %v310 = vld [vmem:[%s1 + $0x88] sm:$0xf]
      %v311 = vld [vmem:[%s1 + $0x8c] sm:$0xf]
      %v312 = vld [vmem:[%s1 + $0x90] sm:$0xf]
      %v313 = vld [vmem:[%s1 + $0x94] sm:$0xf]
      %v314 = vld [vmem:[%s1 + $0x98] sm:$0xf]
      %v315 = vld [vmem:[%s1 + $0x9c] sm:$0xf]
      %v316 = vld [vmem:[%s1 + $0xa0] sm:$0xf]
      %v317 = vld [vmem:[%s1 + $0xa4] sm:$0xf]
      %v318 = vld [vmem:[%s1 + $0xa8] sm:$0xf]
      %v319 = vld [vmem:[%s1 + $0xac] sm:$0xf]
      %v320 = vld [vmem:[%s1 + $0xb0] sm:$0xf]
      %v321 = vld [vmem:[%s1 + $0xb4] sm:$0xf]
      %v322 = vld [vmem:[%s1 + $0xb8] sm:$0xf]
      %v323 = vld [vmem:[%s1 + $0xbc] sm:$0xf]
      %v324 = vld [vmem:[%s1 + $0xc0] sm:$0xf]
      %v325 = vld [vmem:[%s1 + $0xc4] sm:$0xf]
      %v326 = vld [vmem:[%s1 + $0xc8] sm:$0xf]
      %v327 = vld [vmem:[%s1 + $0xcc] sm:$0xf]
      %v328 = vld [vmem:[%s1 + $0xd0] sm:$0xf]
      %v329 = vld [vmem:[%s1 + $0xd4] sm:$0xf]
      %v330 = vld [vmem:[%s1 + $0xd8] sm:$0xf]
      %v331 = vld [vmem:[%s1 + $0xdc] sm:$0xf]
      %v332 = vld [vmem:[%s1 + $0xe0] sm:$0xf]
      %v333 = vld [vmem:[%s1 + $0xe4] sm:$0xf]
      %v334 = vld [vmem:[%s1 + $0xe8] sm:$0xf]
      %v335 = vld [vmem:[%s1 + $0xec] sm:$0xf]
      %v336 = vld [vmem:[%s1 + $0xf0] sm:$0xf]
      %v337 = vld [vmem:[%s1 + $0xf4] sm:$0xf]
      %v338 = vld [vmem:[%s1 + $0xf8] sm:$0xf]
      %v339 = vld [vmem:[%s1 + $0xfc] sm:$0xf]
      %v340 = vld [vmem:[%s1 + $0x100] sm:$0xf]
      %v341 = vld [vmem:[%s1 + $0x104] sm:$0xf]
      %v342 = vld [vmem:[%s1 + $0x108] sm:$0xf]
      %v343 = vld [vmem:[%s1 + $0x10c] sm:$0xf]
      %v344 = vld [vmem:[%s1 + $0x110] sm:$0xf]
      %v345 = vld [vmem:[%s1 + $0x114] sm:$0xf]
      %v346 = vld [vmem:[%s1 + $0x118] sm:$0xf]
      %v347 = vld [vmem:[%s1 + $0x11c] sm:$0xf]
      %v348 = vld [vmem:[%s1 + $0x120] sm:$0xf]
      %v349 = vld [vmem:[%s1 + $0x124] sm:$0xf]
      %v350 = vld [vmem:[%s1 + $0x128] sm:$0xf]
      %v351 = vld [vmem:[%s1 + $0x12c] sm:$0xf]
      %v352 = vld [vmem:[%s1 + $0x130] sm:$0xf]
      %v353 = vld [vmem:[%s1 + $0x134] sm:$0xf]
      %v354 = vld [vmem:[%s1 + $0x138] sm:$0xf]
      %v355 = vld [vmem:[%s1 + $0x13c] sm:$0xf]
      %v356 = vld [vmem:[%s1 + $0x140] sm:$0xf]
      %v357 = vld [vmem:[%s1 + $0x144] sm:$0xf]
      %v358 = vld [vmem:[%s1 + $0x148] sm:$0xf]
      %v359 = vld [vmem:[%s1 + $0x14c] sm:$0xf]
      %v360 = vld [vmem:[%s1 + $0x150] sm:$0xf]
      %v361 = vld [vmem:[%s1 + $0x154] sm:$0xf]
      %v362 = vld [vmem:[%s1 + $0x158] sm:$0xf]
      %v363 = vld [vmem:[%s1 + $0x15c] sm:$0xf]
      %v364 = vld [vmem:[%s1 + $0x160] sm:$0xf]
      %v365 = vld [vmem:[%s1 + $0x164] sm:$0xf]
      %v366 = vld [vmem:[%s1 + $0x168] sm:$0xf]
      %v367 = vld [vmem:[%s1 + $0x16c] sm:$0xf]
      %v368 = vld [vmem:[%s1 + $0x170] sm:$0xf]
      %v369 = vld [vmem:[%s1 + $0x174] sm:$0xf]
      %v370 = vld [vmem:[%s1 + $0x178] sm:$0xf]
      %v371 = vld [vmem:[%s1 + $0x17c] sm:$0xf]
      %v372 = vld [vmem:[%s1 + $0x180] sm:$0xf]
      %v373 = vld [vmem:[%s1 + $0x184] sm:$0xf]
      %v374 = vld [vmem:[%s2] sm:$0x1]
      %v376 = vperm.slane %v374, 0
      %v476 = vunpack.c.l.b16 %v276
      %v477 = vunpack.c.l.b16 %v277
      %v478 = vunpack.c.l.b16 %v278
      %v479 = vunpack.c.l.b16 %v279
      %v480 = vunpack.c.l.b16 %v280
      %v481 = vunpack.c.l.b16 %v281
      %v482 = vunpack.c.l.b16 %v282
      %v483 = vunpack.c.l.b16 %v283
      %v484 = vunpack.c.l.b16 %v284
      %v485 = vunpack.c.l.b16 %v285
      %v486 = vunpack.c.l.b16 %v286
      %v487 = vunpack.c.l.b16 %v287
      %v488 = vunpack.c.l.b16 %v288
      %v489 = vunpack.c.l.b16 %v289
      %v490 = vunpack.c.l.b16 %v290
      %v491 = vunpack.c.l.b16 %v291
      %v492 = vunpack.c.l.b16 %v292
      %v493 = vunpack.c.l.b16 %v293
      %v494 = vunpack.c.l.b16 %v294
      %v495 = vunpack.c.l.b16 %v295
      %v496 = vunpack.c.l.b16 %v296
      %v497 = vunpack.c.l.b16 %v297
      %v498 = vunpack.c.l.b16 %v298
      %v499 = vunpack.c.l.b16 %v299
      %v500 = vunpack.c.l.b16 %v300
      %v501 = vunpack.c.l.b16 %v301
      %v502 = vunpack.c.l.b16 %v302
      %v503 = vunpack.c.l.b16 %v303
      %v504 = vunpack.c.l.b16 %v304
      %v505 = vunpack.c.l.b16 %v305
      %v506 = vunpack.c.l.b16 %v306
      %v507 = vunpack.c.l.b16 %v307
      %v508 = vunpack.c.l.b16 %v308
      %v509 = vunpack.c.l.b16 %v309
      %v510 = vunpack.c.l.b16 %v310
      %v511 = vunpack.c.l.b16 %v311
      %v512 = vunpack.c.l.b16 %v312
      %v513 = vunpack.c.l.b16 %v313
      %v514 = vunpack.c.l.b16 %v314
      %v515 = vunpack.c.l.b16 %v315
      %v516 = vunpack.c.l.b16 %v316
      %v517 = vunpack.c.l.b16 %v317
      %v518 = vunpack.c.l.b16 %v318
      %v519 = vunpack.c.l.b16 %v319
      %v520 = vunpack.c.l.b16 %v320
      %v521 = vunpack.c.l.b16 %v321
      %v522 = vunpack.c.l.b16 %v322
      %v523 = vunpack.c.l.b16 %v323
      %v524 = vunpack.c.l.b16 %v324
      %v525 = vunpack.c.l.b16 %v325
      %v526 = vunpack.c.l.b16 %v326
      %v527 = vunpack.c.l.b16 %v327
      %v528 = vunpack.c.l.b16 %v328
      %v529 = vunpack.c.l.b16 %v329
      %v530 = vunpack.c.l.b16 %v330
      %v531 = vunpack.c.l.b16 %v331
      %v532 = vunpack.c.l.b16 %v332
      %v533 = vunpack.c.l.b16 %v333
      %v534 = vunpack.c.l.b16 %v334
      %v535 = vunpack.c.l.b16 %v335
      %v536 = vunpack.c.l.b16 %v336
      %v537 = vunpack.c.l.b16 %v337
      %v538 = vunpack.c.l.b16 %v338
      %v539 = vunpack.c.l.b16 %v339
      %v540 = vunpack.c.l.b16 %v340
      %v541 = vunpack.c.l.b16 %v341
      %v542 = vunpack.c.l.b16 %v342
      %v543 = vunpack.c.l.b16 %v343
      %v544 = vunpack.c.l.b16 %v344
      %v545 = vunpack.c.l.b16 %v345
      %v546 = vunpack.c.l.b16 %v346
      %v547 = vunpack.c.l.b16 %v347
      %v548 = vunpack.c.l.b16 %v348
      %v549 = vunpack.c.l.b16 %v349
      %v550 = vunpack.c.l.b16 %v350
      %v551 = vunpack.c.l.b16 %v351
      %v552 = vunpack.c.l.b16 %v352
      %v553 = vunpack.c.l.b16 %v353
      %v554 = vunpack.c.l.b16 %v354
      %v555 = vunpack.c.l.b16 %v355
      %v556 = vunpack.c.l.b16 %v356
      %v557 = vunpack.c.l.b16 %v357
      %v558 = vunpack.c.l.b16 %v358
      %v559 = vunpack.c.l.b16 %v359
      %v560 = vunpack.c.l.b16 %v360
      %v561 = vunpack.c.l.b16 %v361
      %v562 = vunpack.c.l.b16 %v362
      %v563 = vunpack.c.l.b16 %v363
      %v564 = vunpack.c.l.b16 %v364
      %v565 = vunpack.c.l.b16 %v365
      %v566 = vunpack.c.l.b16 %v366
      %v567 = vunpack.c.l.b16 %v367
      %v568 = vunpack.c.l.b16 %v368
      %v569 = vunpack.c.l.b16 %v369
      %v570 = vunpack.c.l.b16 %v370
      %v571 = vunpack.c.l.b16 %v371
      %v572 = vunpack.c.l.b16 %v372
      %v573 = vunpack.c.l.b16 %v373
      %v574 = vpack.c.b16 %v477, %v476
      %v575 = vpack.c.b16 %v479, %v478
      %v576 = vpack.c.b16 %v481, %v480
      %v577 = vpack.c.b16 %v483, %v482
      %v578 = vpack.c.b16 %v485, %v484
      %v579 = vpack.c.b16 %v487, %v486
      %v580 = vpack.c.b16 %v489, %v488
      %v581 = vpack.c.b16 %v491, %v490
      %v582 = vpack.c.b16 %v493, %v492
      %v583 = vpack.c.b16 %v495, %v494
      %v584 = vpack.c.b16 %v497, %v496
      %v585 = vpack.c.b16 %v499, %v498
      %v586 = vpack.c.b16 %v501, %v500
      %v587 = vpack.c.b16 %v503, %v502
      %v588 = vpack.c.b16 %v505, %v504
      %v589 = vpack.c.b16 %v507, %v506
      %v590 = vpack.c.b16 %v509, %v508
      %v591 = vpack.c.b16 %v511, %v510
      %v592 = vpack.c.b16 %v513, %v512
      %v593 = vpack.c.b16 %v515, %v514
      %v594 = vpack.c.b16 %v517, %v516
      %v595 = vpack.c.b16 %v519, %v518
      %v596 = vpack.c.b16 %v521, %v520
      %v597 = vpack.c.b16 %v523, %v522
      %v598 = vpack.c.b16 %v525, %v524
      %v599 = vpack.c.b16 %v527, %v526
      %v600 = vpack.c.b16 %v529, %v528
      %v601 = vpack.c.b16 %v531, %v530
      %v602 = vpack.c.b16 %v533, %v532
      %v603 = vpack.c.b16 %v535, %v534
      %v604 = vpack.c.b16 %v537, %v536
      %v605 = vpack.c.b16 %v539, %v538
      %v606 = vpack.c.b16 %v541, %v540
      %v607 = vpack.c.b16 %v543, %v542
      %v608 = vpack.c.b16 %v545, %v544
      %v609 = vpack.c.b16 %v547, %v546
      %v610 = vpack.c.b16 %v549, %v548
      %v611 = vpack.c.b16 %v551, %v550
      %v612 = vpack.c.b16 %v553, %v552
      %v613 = vpack.c.b16 %v555, %v554
      %v614 = vpack.c.b16 %v557, %v556
      %v615 = vpack.c.b16 %v559, %v558
      %v616 = vpack.c.b16 %v561, %v560
      %v617 = vpack.c.b16 %v563, %v562
      %v618 = vpack.c.b16 %v565, %v564
      %v619 = vpack.c.b16 %v567, %v566
      %v620 = vpack.c.b16 %v569, %v568
      %v621 = vpack.c.b16 %v571, %v570
      %v622 = vpack.c.b16 %v573, %v572
      %vm672 = vcmask 130048
      %v674 = vsel %vm672, %v268, 0
      %v677 = vsel %vm672, %v275, 0
      %679 = vmatpush.bf16.msra.mxu0 %v581
      %680 = vmatpush.bf16.msra.mxu0 %v580
      %681 = vmatpush.bf16.msra.mxu0 %v579
      %682 = vmatpush.bf16.msra.mxu0 %v578
      %683 = vmatpush.bf16.msra.mxu0 %v577
      %684 = vmatpush.bf16.msra.mxu0 %v576
      %685 = vmatpush.bf16.msra.mxu0 %v575
      %686 = vmatpush.bf16.msra.mxu0 %v574
      %687 = vmatmul.bf16.gmra.mxu0 %v262
      %v688 = vpop.f32.mrf.mxu0
      %v689 = vadd.f32 %v376, %v688
      %v690 = vpop.f32.mrf.mxu0
      %v691 = vadd.f32 %v376, %v690
      %692 = vmatmul.bf16.gmra.mxu0 %v269
      %v693 = vpop.f32.mrf.mxu0
      %v694 = vadd.f32 %v376, %v693
      %v695 = vpop.f32.mrf.mxu0
      %v696 = vadd.f32 %v376, %v695
      %697 = vdwg.mxu0
      %698 = vmatpush.bf16.msra.mxu0 %v589
      %699 = vmatpush.bf16.msra.mxu0 %v588
      %700 = vmatpush.bf16.msra.mxu0 %v587
      %701 = vmatpush.bf16.msra.mxu0 %v586
      %702 = vmatpush.bf16.msra.mxu0 %v585
      %703 = vmatpush.bf16.msra.mxu0 %v584
      %704 = vmatpush.bf16.msra.mxu0 %v583
      %705 = vmatpush.bf16.msra.mxu0 %v582
      %706 = vmatmul.bf16.gmra.mxu0 %v263
      %v707 = vpop.f32.mrf.mxu0
      %v708 = vadd.f32 %v689, %v707
      %v709 = vpop.f32.mrf.mxu0
      %v710 = vadd.f32 %v691, %v709
      %711 = vmatmul.bf16.gmra.mxu0 %v270
      %v712 = vpop.f32.mrf.mxu0
      %v713 = vadd.f32 %v694, %v712
      %v714 = vpop.f32.mrf.mxu0
      %v715 = vadd.f32 %v696, %v714
      %716 = vdwg.mxu0
      %717 = vmatpush.bf16.msra.mxu0 %v597
      %718 = vmatpush.bf16.msra.mxu0 %v596
      %719 = vmatpush.bf16.msra.mxu0 %v595
      %720 = vmatpush.bf16.msra.mxu0 %v594
      %721 = vmatpush.bf16.msra.mxu0 %v593
      %722 = vmatpush.bf16.msra.mxu0 %v592
      %723 = vmatpush.bf16.msra.mxu0 %v591
      %724 = vmatpush.bf16.msra.mxu0 %v590
      %725 = vmatmul.bf16.gmra.mxu0 %v264
      %v726 = vpop.f32.mrf.mxu0
      %v727 = vadd.f32 %v708, %v726
      %v728 = vpop.f32.mrf.mxu0
      %v729 = vadd.f32 %v710, %v728
      %730 = vmatmul.bf16.gmra.mxu0 %v271
      %v731 = vpop.f32.mrf.mxu0
      %v732 = vadd.f32 %v713, %v731
      %v733 = vpop.f32.mrf.mxu0
      %v734 = vadd.f32 %v715, %v733
      %735 = vdwg.mxu0
      %736 = vmatpush.bf16.msra.mxu0 %v605
      %737 = vmatpush.bf16.msra.mxu0 %v604
      %738 = vmatpush.bf16.msra.mxu0 %v603
      %739 = vmatpush.bf16.msra.mxu0 %v602
      %740 = vmatpush.bf16.msra.mxu0 %v601
      %741 = vmatpush.bf16.msra.mxu0 %v600
      %742 = vmatpush.bf16.msra.mxu0 %v599
      %743 = vmatpush.bf16.msra.mxu0 %v598
      %744 = vmatmul.bf16.gmra.mxu0 %v265
      %v745 = vpop.f32.mrf.mxu0
      %v746 = vadd.f32 %v727, %v745
      %v747 = vpop.f32.mrf.mxu0
      %v748 = vadd.f32 %v729, %v747
      %749 = vmatmul.bf16.gmra.mxu0 %v272
      %v750 = vpop.f32.mrf.mxu0
      %v751 = vadd.f32 %v732, %v750
      %v752 = vpop.f32.mrf.mxu0
      %v753 = vadd.f32 %v734, %v752
      %754 = vdwg.mxu0
      %755 = vmatpush.bf16.msra.mxu0 %v613
      %756 = vmatpush.bf16.msra.mxu0 %v612
      %757 = vmatpush.bf16.msra.mxu0 %v611
      %758 = vmatpush.bf16.msra.mxu0 %v610
      %759 = vmatpush.bf16.msra.mxu0 %v609
      %760 = vmatpush.bf16.msra.mxu0 %v608
      %761 = vmatpush.bf16.msra.mxu0 %v607
      %762 = vmatpush.bf16.msra.mxu0 %v606
      %763 = vmatmul.bf16.gmra.mxu0 %v266
      %v764 = vpop.f32.mrf.mxu0
      %v765 = vadd.f32 %v746, %v764
      %v766 = vpop.f32.mrf.mxu0
      %v767 = vadd.f32 %v748, %v766
      %768 = vmatmul.bf16.gmra.mxu0 %v273
      %v769 = vpop.f32.mrf.mxu0
      %v770 = vadd.f32 %v751, %v769
      %v771 = vpop.f32.mrf.mxu0
      %v772 = vadd.f32 %v753, %v771
      %773 = vdwg.mxu0
      %774 = vmatpush.bf16.msra.mxu0 %v621
      %775 = vmatpush.bf16.msra.mxu0 %v620
      %776 = vmatpush.bf16.msra.mxu0 %v619
      %777 = vmatpush.bf16.msra.mxu0 %v618
      %778 = vmatpush.bf16.msra.mxu0 %v617
      %779 = vmatpush.bf16.msra.mxu0 %v616
      %780 = vmatpush.bf16.msra.mxu0 %v615
      %781 = vmatpush.bf16.msra.mxu0 %v614
      %782 = vmatmul.bf16.gmra.mxu0 %v267
      %v783 = vpop.f32.mrf.mxu0
      %v784 = vadd.f32 %v765, %v783
      %v785 = vpop.f32.mrf.mxu0
      %v786 = vadd.f32 %v767, %v785
      %787 = vmatmul.bf16.gmra.mxu0 %v274
      %v788 = vpop.f32.mrf.mxu0
      %v789 = vadd.f32 %v770, %v788
      %v790 = vpop.f32.mrf.mxu0
      %v791 = vadd.f32 %v772, %v790
      %792 = vdwg.mxu0
      %793 = vmatpush.bf16.msra.mxu0 0
      %794 = vmatpush.bf16.msra.mxu0 0
      %795 = vmatpush.bf16.msra.mxu0 0
      %796 = vmatpush.bf16.msra.mxu0 0
      %797 = vmatpush.bf16.msra.mxu0 0
      %798 = vmatpush.bf16.msra.mxu0 0
      %799 = vmatpush.bf16.msra.mxu0 0
      %800 = vmatpush.bf16.msra.mxu0 %v622
      %801 = vmatmul.bf16.gmra.mxu0 %v674
      %v802 = vpop.f32.mrf.mxu0
      %v803 = vadd.f32 %v784, %v802
      %v804 = vpop.f32.mrf.mxu0
      %v805 = vadd.f32 %v786, %v804
      %806 = vmatmul.bf16.gmra.mxu0 %v677
      %v807 = vpop.f32.mrf.mxu0
      %v808 = vadd.f32 %v789, %v807
      %v809 = vpop.f32.mrf.mxu0
      %v810 = vadd.f32 %v791, %v809
      %811 = vdwg.mxu0
      %v812 = vmax.f32 %v803, 0.0
      %v813 = vmax.f32 %v805, 0.0
      %v814 = vmax.f32 %v808, 0.0
      %v815 = vmax.f32 %v810, 0.0
      %v816 = vpack.c.bf16 %v813, %v812
      %v817 = vpack.c.bf16 %v815, %v814
      %v818 = vld [vmem:[%s3] sm:$0xff]
      %v819 = vld [vmem:[%s3 + $0x8] sm:$0xff]
      %v820 = vld [vmem:[%s3 + $0x10] sm:$0xff]
      %v821 = vld [vmem:[%s3 + $0x18] sm:$0xf]
      %v822 = vld [vmem:[%s3 + $0x1c] sm:$0xff]
      %v823 = vld [vmem:[%s3 + $0x24] sm:$0xff]
      %v824 = vld [vmem:[%s3 + $0x2c] sm:$0xff]
      %v825 = vld [vmem:[%s3 + $0x34] sm:$0xf]
      %v826 = vld [vmem:[%s3 + $0x38] sm:$0xff]
      %v827 = vld [vmem:[%s3 + $0x40] sm:$0xff]
      %v828 = vld [vmem:[%s3 + $0x48] sm:$0xff]
      %v829 = vld [vmem:[%s3 + $0x50] sm:$0xf]
      %v830 = vld [vmem:[%s3 + $0x54] sm:$0xff]
      %v831 = vld [vmem:[%s3 + $0x5c] sm:$0xff]
      %v832 = vld [vmem:[%s3 + $0x64] sm:$0xff]
      %v833 = vld [vmem:[%s3 + $0x6c] sm:$0xf]
      %v834 = vld [vmem:[%s3 + $0x70] sm:$0xff]
      %v835 = vld [vmem:[%s3 + $0x78] sm:$0xff]
      %v836 = vld [vmem:[%s3 + $0x80] sm:$0xff]
      %v837 = vld [vmem:[%s3 + $0x88] sm:$0xf]
      %v838 = vld [vmem:[%s3 + $0x8c] sm:$0xff]
      %v839 = vld [vmem:[%s3 + $0x94] sm:$0xff]
      %v840 = vld [vmem:[%s3 + $0x9c] sm:$0xff]
      %v841 = vld [vmem:[%s3 + $0xa4] sm:$0xf]
      %v842 = vld [vmem:[%s3 + $0xa8] sm:$0xff]
      %v843 = vld [vmem:[%s3 + $0xb0] sm:$0xff]
      %v844 = vld [vmem:[%s3 + $0xb8] sm:$0xff]
      %v845 = vld [vmem:[%s3 + $0xc0] sm:$0xf]
      %v846 = vld [vmem:[%s3 + $0xc4] sm:$0xff]
      %v847 = vld [vmem:[%s3 + $0xcc] sm:$0xff]
      %v848 = vld [vmem:[%s3 + $0xd4] sm:$0xff]
      %v849 = vld [vmem:[%s3 + $0xdc] sm:$0xf]
      %v850 = vld [vmem:[%s3 + $0xe0] sm:$0xff]
      %v851 = vld [vmem:[%s3 + $0xe8] sm:$0xff]
      %v852 = vld [vmem:[%s3 + $0xf0] sm:$0xff]
      %v853 = vld [vmem:[%s3 + $0xf8] sm:$0xf]
      %v854 = vld [vmem:[%s3 + $0xfc] sm:$0xff]
      %v855 = vld [vmem:[%s3 + $0x104] sm:$0xff]
      %v856 = vld [vmem:[%s3 + $0x10c] sm:$0xff]
      %v857 = vld [vmem:[%s3 + $0x114] sm:$0xf]
      %v858 = vld [vmem:[%s3 + $0x118] sm:$0xff]
      %v859 = vld [vmem:[%s3 + $0x120] sm:$0xff]
      %v860 = vld [vmem:[%s3 + $0x128] sm:$0xff]
      %v861 = vld [vmem:[%s3 + $0x130] sm:$0xf]
      %v862 = vld [vmem:[%s3 + $0x134] sm:$0xff]
      %v863 = vld [vmem:[%s3 + $0x13c] sm:$0xff]
      %v864 = vld [vmem:[%s3 + $0x144] sm:$0xff]
      %v865 = vld [vmem:[%s3 + $0x14c] sm:$0xf]
      %v866 = vld [vmem:[%s3 + $0x150] sm:$0xff]
      %v867 = vld [vmem:[%s3 + $0x158] sm:$0xff]
      %v868 = vld [vmem:[%s3 + $0x160] sm:$0xff]
      %v869 = vld [vmem:[%s3 + $0x168] sm:$0xf]
      %v870 = vld [vmem:[%s3 + $0x16c] sm:$0xff]
      %v871 = vld [vmem:[%s3 + $0x174] sm:$0xff]
      %v872 = vld [vmem:[%s3 + $0x17c] sm:$0xff]
      %v873 = vld [vmem:[%s3 + $0x184] sm:$0xf]
      %v874 = vld [vmem:[%s3 + $0x188] sm:$0xff]
      %v875 = vld [vmem:[%s3 + $0x190] sm:$0xff]
      %v876 = vld [vmem:[%s3 + $0x198] sm:$0xff]
      %v877 = vld [vmem:[%s3 + $0x1a0] sm:$0xf]
      %v878 = vld [vmem:[%s3 + $0x1a4] sm:$0xff]
      %v879 = vld [vmem:[%s3 + $0x1ac] sm:$0xff]
      %v880 = vld [vmem:[%s3 + $0x1b4] sm:$0xff]
      %v881 = vld [vmem:[%s3 + $0x1bc] sm:$0xf]
      %v882 = vld [vmem:[%s4] sm:$0x7f]
      %v884 = vperm.slane %v882, 0
      %v885 = vperm.slane %v882, 1
      %v886 = vperm.slane %v882, 2
      %v887 = vperm.slane %v882, 3
      %v888 = vperm.slane %v882, 4
      %v889 = vperm.slane %v882, 5
      %v890 = vperm.slane %v882, 6
      %v962 = vunpack.c.l.b16 %v818
      %v963 = vunpack.c.h.b16 %v818
      %v964 = vunpack.c.l.b16 %v819
      %v965 = vunpack.c.h.b16 %v819
      %v966 = vunpack.c.l.b16 %v820
      %v967 = vunpack.c.h.b16 %v820
      %v968 = vunpack.c.l.b16 %v821
      %v969 = vunpack.c.l.b16 %v822
      %v970 = vunpack.c.h.b16 %v822
      %v971 = vunpack.c.l.b16 %v823
      %v972 = vunpack.c.h.b16 %v823
      %v973 = vunpack.c.l.b16 %v824
      %v974 = vunpack.c.h.b16 %v824
      %v975 = vunpack.c.l.b16 %v825
      %v976 = vunpack.c.l.b16 %v826
      %v977 = vunpack.c.h.b16 %v826
      %v978 = vunpack.c.l.b16 %v827
      %v979 = vunpack.c.h.b16 %v827
      %v980 = vunpack.c.l.b16 %v828
      %v981 = vunpack.c.h.b16 %v828
      %v982 = vunpack.c.l.b16 %v829
      %v983 = vunpack.c.l.b16 %v830
      %v984 = vunpack.c.h.b16 %v830
      %v985 = vunpack.c.l.b16 %v831
      %v986 = vunpack.c.h.b16 %v831
      %v987 = vunpack.c.l.b16 %v832
      %v988 = vunpack.c.h.b16 %v832
      %v989 = vunpack.c.l.b16 %v833
      %v990 = vunpack.c.l.b16 %v834
      %v991 = vunpack.c.h.b16 %v834
      %v992 = vunpack.c.l.b16 %v835
      %v993 = vunpack.c.h.b16 %v835
      %v994 = vunpack.c.l.b16 %v836
      %v995 = vunpack.c.h.b16 %v836
      %v996 = vunpack.c.l.b16 %v837
      %v997 = vunpack.c.l.b16 %v838
      %v998 = vunpack.c.h.b16 %v838
      %v999 = vunpack.c.l.b16 %v839
      %v1000 = vunpack.c.h.b16 %v839
      %v1001 = vunpack.c.l.b16 %v840
      %v1002 = vunpack.c.h.b16 %v840
      %v1003 = vunpack.c.l.b16 %v841
      %v1004 = vunpack.c.l.b16 %v842
      %v1005 = vunpack.c.h.b16 %v842
      %v1006 = vunpack.c.l.b16 %v843
      %v1007 = vunpack.c.h.b16 %v843
      %v1008 = vunpack.c.l.b16 %v844
      %v1009 = vunpack.c.h.b16 %v844
      %v1010 = vunpack.c.l.b16 %v845
      %v1011 = vunpack.c.l.b16 %v846
      %v1012 = vunpack.c.h.b16 %v846
      %v1013 = vunpack.c.l.b16 %v847
      %v1014 = vunpack.c.h.b16 %v847
      %v1015 = vunpack.c.l.b16 %v848
      %v1016 = vunpack.c.h.b16 %v848
      %v1017 = vunpack.c.l.b16 %v849
      %v1018 = vunpack.c.l.b16 %v850
      %v1019 = vunpack.c.h.b16 %v850
      %v1020 = vunpack.c.l.b16 %v851
      %v1021 = vunpack.c.h.b16 %v851
      %v1022 = vunpack.c.l.b16 %v852
      %v1023 = vunpack.c.h.b16 %v852
      %v1024 = vunpack.c.l.b16 %v853
      %v1025 = vunpack.c.l.b16 %v854
      %v1026 = vunpack.c.h.b16 %v854
      %v1027 = vunpack.c.l.b16 %v855
      %v1028 = vunpack.c.h.b16 %v855
      %v1029 = vunpack.c.l.b16 %v856
      %v1030 = vunpack.c.h.b16 %v856
      %v1031 = vunpack.c.l.b16 %v857
      %v1032 = vunpack.c.l.b16 %v858
      %v1033 = vunpack.c.h.b16 %v858
      %v1034 = vunpack.c.l.b16 %v859
      %v1035 = vunpack.c.h.b16 %v859
      %v1036 = vunpack.c.l.b16 %v860
      %v1037 = vunpack.c.h.b16 %v860
      %v1038 = vunpack.c.l.b16 %v861
      %v1039 = vunpack.c.l.b16 %v862
      %v1040 = vunpack.c.h.b16 %v862
      %v1041 = vunpack.c.l.b16 %v863
      %v1042 = vunpack.c.h.b16 %v863
      %v1043 = vunpack.c.l.b16 %v864
      %v1044 = vunpack.c.h.b16 %v864
      %v1045 = vunpack.c.l.b16 %v865
      %v1046 = vunpack.c.l.b16 %v866
      %v1047 = vunpack.c.h.b16 %v866
      %v1048 = vunpack.c.l.b16 %v867
      %v1049 = vunpack.c.h.b16 %v867
      %v1050 = vunpack.c.l.b16 %v868
      %v1051 = vunpack.c.h.b16 %v868
      %v1052 = vunpack.c.l.b16 %v869
      %v1053 = vunpack.c.l.b16 %v870
      %v1054 = vunpack.c.h.b16 %v870
      %v1055 = vunpack.c.l.b16 %v871
      %v1056 = vunpack.c.h.b16 %v871
      %v1057 = vunpack.c.l.b16 %v872
      %v1058 = vunpack.c.h.b16 %v872
      %v1059 = vunpack.c.l.b16 %v873
      %v1060 = vunpack.c.l.b16 %v874
      %v1061 = vunpack.c.h.b16 %v874
      %v1062 = vunpack.c.l.b16 %v875
      %v1063 = vunpack.c.h.b16 %v875
      %v1064 = vunpack.c.l.b16 %v876
      %v1065 = vunpack.c.h.b16 %v876
      %v1066 = vunpack.c.l.b16 %v877
      %v1067 = vunpack.c.l.b16 %v878
      %v1068 = vunpack.c.h.b16 %v878
      %v1069 = vunpack.c.l.b16 %v879
      %v1070 = vunpack.c.h.b16 %v879
      %v1071 = vunpack.c.l.b16 %v880
      %v1072 = vunpack.c.h.b16 %v880
      %v1073 = vunpack.c.l.b16 %v881
      %v1074 = vpack.c.b16 %v969, %v962
      %v1075 = vpack.c.b16 %v970, %v963
      %v1076 = vpack.c.b16 %v971, %v964
      %v1077 = vpack.c.b16 %v972, %v965
      %v1078 = vpack.c.b16 %v973, %v966
      %v1079 = vpack.c.b16 %v974, %v967
      %v1080 = vpack.c.b16 %v975, %v968
      %v1081 = vpack.c.b16 %v983, %v976
      %v1082 = vpack.c.b16 %v984, %v977
      %v1083 = vpack.c.b16 %v985, %v978
      %v1084 = vpack.c.b16 %v986, %v979
      %v1085 = vpack.c.b16 %v987, %v980
      %v1086 = vpack.c.b16 %v988, %v981
      %v1087 = vpack.c.b16 %v989, %v982
      %v1088 = vpack.c.b16 %v997, %v990
      %v1089 = vpack.c.b16 %v998, %v991
      %v1090 = vpack.c.b16 %v999, %v992
      %v1091 = vpack.c.b16 %v1000, %v993
      %v1092 = vpack.c.b16 %v1001, %v994
      %v1093 = vpack.c.b16 %v1002, %v995
      %v1094 = vpack.c.b16 %v1003, %v996
      %v1095 = vpack.c.b16 %v1011, %v1004
      %v1096 = vpack.c.b16 %v1012, %v1005
      %v1097 = vpack.c.b16 %v1013, %v1006
      %v1098 = vpack.c.b16 %v1014, %v1007
      %v1099 = vpack.c.b16 %v1015, %v1008
      %v1100 = vpack.c.b16 %v1016, %v1009
      %v1101 = vpack.c.b16 %v1017, %v1010
      %v1102 = vpack.c.b16 %v1025, %v1018
      %v1103 = vpack.c.b16 %v1026, %v1019
      %v1104 = vpack.c.b16 %v1027, %v1020
      %v1105 = vpack.c.b16 %v1028, %v1021
      %v1106 = vpack.c.b16 %v1029, %v1022
      %v1107 = vpack.c.b16 %v1030, %v1023
      %v1108 = vpack.c.b16 %v1031, %v1024
      %v1109 = vpack.c.b16 %v1039, %v1032
      %v1110 = vpack.c.b16 %v1040, %v1033
      %v1111 = vpack.c.b16 %v1041, %v1034
      %v1112 = vpack.c.b16 %v1042, %v1035
      %v1113 = vpack.c.b16 %v1043, %v1036
      %v1114 = vpack.c.b16 %v1044, %v1037
      %v1115 = vpack.c.b16 %v1045, %v1038
      %v1116 = vpack.c.b16 %v1053, %v1046
      %v1117 = vpack.c.b16 %v1054, %v1047
      %v1118 = vpack.c.b16 %v1055, %v1048
      %v1119 = vpack.c.b16 %v1056, %v1049
      %v1120 = vpack.c.b16 %v1057, %v1050
      %v1121 = vpack.c.b16 %v1058, %v1051
      %v1122 = vpack.c.b16 %v1059, %v1052
      %v1123 = vpack.c.b16 %v1067, %v1060
      %v1124 = vpack.c.b16 %v1068, %v1061
      %v1125 = vpack.c.b16 %v1069, %v1062
      %v1126 = vpack.c.b16 %v1070, %v1063
      %v1127 = vpack.c.b16 %v1071, %v1064
      %v1128 = vpack.c.b16 %v1072, %v1065
      %v1129 = vpack.c.b16 %v1073, %v1066
      %1186 = vmatpush.bf16.msra.mxu0 %v1123
      %1187 = vmatpush.bf16.msra.mxu0 %v1116
      %1188 = vmatpush.bf16.msra.mxu0 %v1109
      %1189 = vmatpush.bf16.msra.mxu0 %v1102
      %1190 = vmatpush.bf16.msra.mxu0 %v1095
      %1191 = vmatpush.bf16.msra.mxu0 %v1088
      %1192 = vmatpush.bf16.msra.mxu0 %v1081
      %1193 = vmatpush.bf16.msra.mxu0 %v1074
      %1194 = vmatmul.bf16.gmra.mxu0 %v816
      %v1195 = vpop.f32.mrf.mxu0
      %v1196 = vadd.f32 %v884, %v1195
      %v1197 = vpop.f32.mrf.mxu0
      %v1198 = vadd.f32 %v884, %v1197
      %1199 = vmatmul.bf16.gmra.mxu0 %v817
      %v1200 = vpop.f32.mrf.mxu0
      %v1201 = vadd.f32 %v884, %v1200
      %v1202 = vpop.f32.mrf.mxu0
      %v1203 = vadd.f32 %v884, %v1202
      %1204 = vdwg.mxu0
      %1205 = vmatpush.bf16.msra.mxu0 %v1124
      %1206 = vmatpush.bf16.msra.mxu0 %v1117
      %1207 = vmatpush.bf16.msra.mxu0 %v1110
      %1208 = vmatpush.bf16.msra.mxu0 %v1103
      %1209 = vmatpush.bf16.msra.mxu0 %v1096
      %1210 = vmatpush.bf16.msra.mxu0 %v1089
      %1211 = vmatpush.bf16.msra.mxu0 %v1082
      %1212 = vmatpush.bf16.msra.mxu0 %v1075
      %1213 = vmatmul.bf16.gmra.mxu0 %v816
      %v1214 = vpop.f32.mrf.mxu0
      %v1215 = vadd.f32 %v885, %v1214
      %v1216 = vpop.f32.mrf.mxu0
      %v1217 = vadd.f32 %v885, %v1216
      %1218 = vmatmul.bf16.gmra.mxu0 %v817
      %v1219 = vpop.f32.mrf.mxu0
      %v1220 = vadd.f32 %v885, %v1219
      %v1221 = vpop.f32.mrf.mxu0
      %v1222 = vadd.f32 %v885, %v1221
      %1223 = vdwg.mxu0
      %1224 = vmatpush.bf16.msra.mxu0 %v1125
      %1225 = vmatpush.bf16.msra.mxu0 %v1118
      %1226 = vmatpush.bf16.msra.mxu0 %v1111
      %1227 = vmatpush.bf16.msra.mxu0 %v1104
      %1228 = vmatpush.bf16.msra.mxu0 %v1097
      %1229 = vmatpush.bf16.msra.mxu0 %v1090
      %1230 = vmatpush.bf16.msra.mxu0 %v1083
      %1231 = vmatpush.bf16.msra.mxu0 %v1076
      %1232 = vmatmul.bf16.gmra.mxu0 %v816
      %v1233 = vpop.f32.mrf.mxu0
      %v1234 = vadd.f32 %v886, %v1233
      %v1235 = vpop.f32.mrf.mxu0
      %v1236 = vadd.f32 %v886, %v1235
      %1237 = vmatmul.bf16.gmra.mxu0 %v817
      %v1238 = vpop.f32.mrf.mxu0
      %v1239 = vadd.f32 %v886, %v1238
      %v1240 = vpop.f32.mrf.mxu0
      %v1241 = vadd.f32 %v886, %v1240
      %1242 = vdwg.mxu0
      %1243 = vmatpush.bf16.msra.mxu0 %v1126
      %1244 = vmatpush.bf16.msra.mxu0 %v1119
      %1245 = vmatpush.bf16.msra.mxu0 %v1112
      %1246 = vmatpush.bf16.msra.mxu0 %v1105
      %1247 = vmatpush.bf16.msra.mxu0 %v1098
      %1248 = vmatpush.bf16.msra.mxu0 %v1091
      %1249 = vmatpush.bf16.msra.mxu0 %v1084
      %1250 = vmatpush.bf16.msra.mxu0 %v1077
      %1251 = vmatmul.bf16.gmra.mxu0 %v816
      %v1252 = vpop.f32.mrf.mxu0
      %v1253 = vadd.f32 %v887, %v1252
      %v1254 = vpop.f32.mrf.mxu0
      %v1255 = vadd.f32 %v887, %v1254
      %1256 = vmatmul.bf16.gmra.mxu0 %v817
      %v1257 = vpop.f32.mrf.mxu0
      %v1258 = vadd.f32 %v887, %v1257
      %v1259 = vpop.f32.mrf.mxu0
      %v1260 = vadd.f32 %v887, %v1259
      %1261 = vdwg.mxu0
      %1262 = vmatpush.bf16.msra.mxu0 %v1127
      %1263 = vmatpush.bf16.msra.mxu0 %v1120
      %1264 = vmatpush.bf16.msra.mxu0 %v1113
      %1265 = vmatpush.bf16.msra.mxu0 %v1106
      %1266 = vmatpush.bf16.msra.mxu0 %v1099
      %1267 = vmatpush.bf16.msra.mxu0 %v1092
      %1268 = vmatpush.bf16.msra.mxu0 %v1085
      %1269 = vmatpush.bf16.msra.mxu0 %v1078
      %1270 = vmatmul.bf16.gmra.mxu0 %v816
      %v1271 = vpop.f32.mrf.mxu0
      %v1272 = vadd.f32 %v888, %v1271
      %v1273 = vpop.f32.mrf.mxu0
      %v1274 = vadd.f32 %v888, %v1273
      %1275 = vmatmul.bf16.gmra.mxu0 %v817
      %v1276 = vpop.f32.mrf.mxu0
      %v1277 = vadd.f32 %v888, %v1276
      %v1278 = vpop.f32.mrf.mxu0
      %v1279 = vadd.f32 %v888, %v1278
      %1280 = vdwg.mxu0
      %1281 = vmatpush.bf16.msra.mxu0 %v1128
      %1282 = vmatpush.bf16.msra.mxu0 %v1121
      %1283 = vmatpush.bf16.msra.mxu0 %v1114
      %1284 = vmatpush.bf16.msra.mxu0 %v1107
      %1285 = vmatpush.bf16.msra.mxu0 %v1100
      %1286 = vmatpush.bf16.msra.mxu0 %v1093
      %1287 = vmatpush.bf16.msra.mxu0 %v1086
      %1288 = vmatpush.bf16.msra.mxu0 %v1079
      %1289 = vmatmul.bf16.gmra.mxu0 %v816
      %v1290 = vpop.f32.mrf.mxu0
      %v1291 = vadd.f32 %v889, %v1290
      %v1292 = vpop.f32.mrf.mxu0
      %v1293 = vadd.f32 %v889, %v1292
      %1294 = vmatmul.bf16.gmra.mxu0 %v817
      %v1295 = vpop.f32.mrf.mxu0
      %v1296 = vadd.f32 %v889, %v1295
      %v1297 = vpop.f32.mrf.mxu0
      %v1298 = vadd.f32 %v889, %v1297
      %1299 = vdwg.mxu0
      %1300 = vmatpush.bf16.msra.mxu0 %v1129
      %1301 = vmatpush.bf16.msra.mxu0 %v1122
      %1302 = vmatpush.bf16.msra.mxu0 %v1115
      %1303 = vmatpush.bf16.msra.mxu0 %v1108
      %1304 = vmatpush.bf16.msra.mxu0 %v1101
      %1305 = vmatpush.bf16.msra.mxu0 %v1094
      %1306 = vmatpush.bf16.msra.mxu0 %v1087
      %1307 = vmatpush.bf16.msra.mxu0 %v1080
      %1308 = vmatmul.bf16.gmra.mxu0 %v816
      %v1309 = vpop.f32.mrf.mxu0
      %v1310 = vadd.f32 %v890, %v1309
      %v1311 = vpop.f32.mrf.mxu0
      %v1312 = vadd.f32 %v890, %v1311
      %1313 = vmatmul.bf16.gmra.mxu0 %v817
      %v1314 = vpop.f32.mrf.mxu0
      %v1315 = vadd.f32 %v890, %v1314
      %v1316 = vpop.f32.mrf.mxu0
      %v1317 = vadd.f32 %v890, %v1316
      %1318 = vdwg.mxu0
      %v1319 = vmul.f32 %v1196, 0.5
      %v1320 = vmul.f32 %v1215, 0.5
      %v1321 = vmul.f32 %v1234, 0.5
      %v1322 = vmul.f32 %v1253, 0.5
      %v1323 = vmul.f32 %v1272, 0.5
      %v1324 = vmul.f32 %v1291, 0.5
      %v1325 = vmul.f32 %v1310, 0.5
      %v1326 = vmul.f32 %v1198, 0.5
      %v1327 = vmul.f32 %v1217, 0.5
      %v1328 = vmul.f32 %v1236, 0.5
      %v1329 = vmul.f32 %v1255, 0.5
      %v1330 = vmul.f32 %v1274, 0.5
      %v1331 = vmul.f32 %v1293, 0.5
      %v1332 = vmul.f32 %v1312, 0.5
      %v1333 = vmul.f32 %v1201, 0.5
      %v1334 = vmul.f32 %v1220, 0.5
      %v1335 = vmul.f32 %v1239, 0.5
      %v1336 = vmul.f32 %v1258, 0.5
      %v1337 = vmul.f32 %v1277, 0.5
      %v1338 = vmul.f32 %v1296, 0.5
      %v1339 = vmul.f32 %v1315, 0.5
      %v1340 = vmul.f32 %v1203, 0.5
      %v1341 = vmul.f32 %v1222, 0.5
      %v1342 = vmul.f32 %v1241, 0.5
      %v1343 = vmul.f32 %v1260, 0.5
      %v1344 = vmul.f32 %v1279, 0.5
      %v1345 = vmul.f32 %v1298, 0.5
      %v1346 = vmul.f32 %v1317, 0.5
      %v1347 = vtanh.pop %v1319
      %v1348 = vtanh.pop %v1320
      %v1349 = vtanh.pop %v1321
      %v1350 = vtanh.pop %v1322
      %v1351 = vtanh.pop %v1323
      %v1352 = vtanh.pop %v1324
      %v1353 = vtanh.pop %v1325
      %v1354 = vtanh.pop %v1326
      %v1355 = vtanh.pop %v1327
      %v1356 = vtanh.pop %v1328
      %v1357 = vtanh.pop %v1329
      %v1358 = vtanh.pop %v1330
      %v1359 = vtanh.pop %v1331
      %v1360 = vtanh.pop %v1332
      %v1361 = vtanh.pop %v1333
      %v1362 = vtanh.pop %v1334
      %v1363 = vtanh.pop %v1335
      %v1364 = vtanh.pop %v1336
      %v1365 = vtanh.pop %v1337
      %v1366 = vtanh.pop %v1338
      %v1367 = vtanh.pop %v1339
      %v1368 = vtanh.pop %v1340
      %v1369 = vtanh.pop %v1341
      %v1370 = vtanh.pop %v1342
      %v1371 = vtanh.pop %v1343
      %v1372 = vtanh.pop %v1344
      %v1373 = vtanh.pop %v1345
      %v1374 = vtanh.pop %v1346
      %v1375 = vmul.f32 %v1347, 0.5
      %v1376 = vmul.f32 %v1348, 0.5
      %v1377 = vmul.f32 %v1349, 0.5
      %v1378 = vmul.f32 %v1350, 0.5
      %v1379 = vmul.f32 %v1351, 0.5
      %v1380 = vmul.f32 %v1352, 0.5
      %v1381 = vmul.f32 %v1353, 0.5
      %v1382 = vmul.f32 %v1354, 0.5
      %v1383 = vmul.f32 %v1355, 0.5
      %v1384 = vmul.f32 %v1356, 0.5
      %v1385 = vmul.f32 %v1357, 0.5
      %v1386 = vmul.f32 %v1358, 0.5
      %v1387 = vmul.f32 %v1359, 0.5
      %v1388 = vmul.f32 %v1360, 0.5
      %v1389 = vmul.f32 %v1361, 0.5
      %v1390 = vmul.f32 %v1362, 0.5
      %v1391 = vmul.f32 %v1363, 0.5
      %v1392 = vmul.f32 %v1364, 0.5
      %v1393 = vmul.f32 %v1365, 0.5
      %v1394 = vmul.f32 %v1366, 0.5
      %v1395 = vmul.f32 %v1367, 0.5
      %v1396 = vmul.f32 %v1368, 0.5
      %v1397 = vmul.f32 %v1369, 0.5
      %v1398 = vmul.f32 %v1370, 0.5
      %v1399 = vmul.f32 %v1371, 0.5
      %v1400 = vmul.f32 %v1372, 0.5
      %v1401 = vmul.f32 %v1373, 0.5
      %v1402 = vmul.f32 %v1374, 0.5
      %v1403 = vadd.f32 %v1375, 0.5
      %v1404 = vadd.f32 %v1376, 0.5
      %v1405 = vadd.f32 %v1377, 0.5
      %v1406 = vadd.f32 %v1378, 0.5
      %v1407 = vadd.f32 %v1379, 0.5
      %v1408 = vadd.f32 %v1380, 0.5
      %v1409 = vadd.f32 %v1381, 0.5
      %v1410 = vadd.f32 %v1382, 0.5
      %v1411 = vadd.f32 %v1383, 0.5
      %v1412 = vadd.f32 %v1384, 0.5
      %v1413 = vadd.f32 %v1385, 0.5
      %v1414 = vadd.f32 %v1386, 0.5
      %v1415 = vadd.f32 %v1387, 0.5
      %v1416 = vadd.f32 %v1388, 0.5
      %v1417 = vadd.f32 %v1389, 0.5
      %v1418 = vadd.f32 %v1390, 0.5
      %v1419 = vadd.f32 %v1391, 0.5
      %v1420 = vadd.f32 %v1392, 0.5
      %v1421 = vadd.f32 %v1393, 0.5
      %v1422 = vadd.f32 %v1394, 0.5
      %v1423 = vadd.f32 %v1395, 0.5
      %v1424 = vadd.f32 %v1396, 0.5
      %v1425 = vadd.f32 %v1397, 0.5
      %v1426 = vadd.f32 %v1398, 0.5
      %v1427 = vadd.f32 %v1399, 0.5
      %v1428 = vadd.f32 %v1400, 0.5
      %v1429 = vadd.f32 %v1401, 0.5
      %v1430 = vadd.f32 %v1402, 0.5
      %1431 = vst [vmem:[%s231] sm:$0xff] %v1403
      %1432 = vst [vmem:[%s231 + $0x8] sm:$0xff] %v1404
      %1433 = vst [vmem:[%s231 + $0x10] sm:$0xff] %v1405
      %1434 = vst [vmem:[%s231 + $0x18] sm:$0xff] %v1406
      %1435 = vst [vmem:[%s231 + $0x20] sm:$0xff] %v1407
      %1436 = vst [vmem:[%s231 + $0x28] sm:$0xff] %v1408
      %1437 = vst.msk [vmem:[%s231 + $0x30] sm:$0xff] %vm672, %v1409
      %1438 = vst [vmem:[%s231 + $0x38] sm:$0xff] %v1410
      %1439 = vst [vmem:[%s231 + $0x40] sm:$0xff] %v1411
      %1440 = vst [vmem:[%s231 + $0x48] sm:$0xff] %v1412
      %1441 = vst [vmem:[%s231 + $0x50] sm:$0xff] %v1413
      %1442 = vst [vmem:[%s231 + $0x58] sm:$0xff] %v1414
      %1443 = vst [vmem:[%s231 + $0x60] sm:$0xff] %v1415
      %1444 = vst.msk [vmem:[%s231 + $0x68] sm:$0xff] %vm672, %v1416
      %1445 = vst [vmem:[%s231 + $0x70] sm:$0xff] %v1417
      %1446 = vst [vmem:[%s231 + $0x78] sm:$0xff] %v1418
      %1447 = vst [vmem:[%s231 + $0x80] sm:$0xff] %v1419
      %1448 = vst [vmem:[%s231 + $0x88] sm:$0xff] %v1420
      %1449 = vst [vmem:[%s231 + $0x90] sm:$0xff] %v1421
      %1450 = vst [vmem:[%s231 + $0x98] sm:$0xff] %v1422
      %1451 = vst.msk [vmem:[%s231 + $0xa0] sm:$0xff] %vm672, %v1423
      %1452 = vst [vmem:[%s231 + $0xa8] sm:$0xff] %v1424
      %1453 = vst [vmem:[%s231 + $0xb0] sm:$0xff] %v1425
      %1454 = vst [vmem:[%s231 + $0xb8] sm:$0xff] %v1426
      %1455 = vst [vmem:[%s231 + $0xc0] sm:$0xff] %v1427
      %1456 = vst [vmem:[%s231 + $0xc8] sm:$0xff] %v1428
      %1457 = vst [vmem:[%s231 + $0xd0] sm:$0xff] %v1429
      %1458 = vst.msk [vmem:[%s231 + $0xd8] sm:$0xff] %vm672, %v1430
      %s1459 = smul.u32 4, %s16
      %p1460 = scmp.lt.s32.totalorder %s1459, 7
      %s1461 = scalar_select %p1460, %s1459, 7
      %s1462 = smul.addr %s1461, 7
      %s1463 = smul.addr %s1462, 8
      %s1464 = scalar_lea.vmem %s5, %s1463
      // Predicated region
      $region41: #{autoencoder_forward.1} parent=39 // pred_check
        %p1465 = pneg %p144
      $region42: #{autoencoder_forward.1} parent=39 // pred_check_branch
        %1467 = sbr.rel (%p1465) target = $region44
      $region43: #{autoencoder_forward.1} parent=39 // pred_region
        %s1468 = smul.u32 4, %s16
      $region44: #{autoencoder_forward.1} parent=39 // pred_fallthru
        _
    $region40: #{autoencoder_forward.1} parent=5 // pred_fallthru
      _
    %p1469 = scmp.le.s32.totalorder 2, %s11
    // Predicated region
    $region45: #{autoencoder_forward.1} parent=5 // pred_check
      %p1470 = pneg %p1469
    $region46: #{autoencoder_forward.1} parent=5 // pred_check_branch
      %1472 = sbr.rel (%p1470) target = $region48
    $region47: #{autoencoder_forward.1} parent=5 // pred_region
      %s1473 = ssub.s32 %s11, 2
      // Predicated region
      $region49: #{autoencoder_forward.1} parent=47 // pred_check
        %p1474 = pneg %p150
      $region50: #{autoencoder_forward.1} parent=47 // pred_check_branch
        %1476 = sbr.rel (%p1474) target = $region52
      $region51: #{autoencoder_forward.1} parent=47 // pred_region
        %s1477 = smul.u32 4, %s17
        %p1478 = scmp.lt.s32.totalorder %s1477, 7
        %s1479 = scalar_select %p1478, %s1477, 7
        %s1480 = smul.addr %s1479, 7
        %s1481 = smul.addr %s1480, 8
        %s1482 = scalar_lea.vmem %s5, %s1481
      $region52: #{autoencoder_forward.1} parent=47 // pred_fallthru
        _
    $region48: #{autoencoder_forward.1} parent=5 // pred_fallthru
      _
  $region6: #{autoencoder_forward.1} parent=0 // loop_footer
    %s15 = sadd.s32 1, %s11
  $region7: #{autoencoder_forward.1} parent=0 // loop_footer_branch
    %10 = sbr.rel target = $region3
  $region8: #{autoencoder_forward.1} parent=0 // loop_exit
    _

</llo_original>
